<compile_context>
chip_gen: v5e
topology: v5e:2x2
jax: 0.10.0
libtpu: 0.0.40
codegen_flags: <defaults>
</compile_context>

<pallas_src>
import jax
import jax.numpy as jnp
from jax.experimental import pallas as pl
from jax.experimental.pallas import tpu as pltpu

MIN_STD = 0.1
LANE = 128


def _round_up(x, m):
    return ((x + m - 1) // m) * m


# ---------------------------------------------------------------------------
# Kernel: full T-step rollout in one invocation, weights resident in VMEM.
# ---------------------------------------------------------------------------

def transition_kernel(emb_ref, h0_ref, s0_ref, noise_ref,
                      w_lin_s_ref, w_ih_ref, w_hh_ref, w_fc1_ref, w_head_ref,
                      b_rz_ref, b_in_ref, b_hn_ref, b_fc1_ref, b_head_ref,
                      out_ref):
    T = emb_ref.shape[0]
    B, H = h0_ref.shape
    L = s0_ref.shape[1]
    Wout = out_ref.shape[2]

    f32 = jnp.float32
    bf16 = lambda v: v.astype(jnp.bfloat16)

    # Loop-invariant weights / biases: load once, reuse across all T steps.
    w_lin_s = w_lin_s_ref[...]
    w_ih = w_ih_ref[...]
    w_hh = w_hh_ref[...]
    w_fc1 = w_fc1_ref[...]
    w_head = w_head_ref[...]
    b_rz = b_rz_ref[...]
    b_in = b_in_ref[...]
    b_hn = b_hn_ref[...]
    b_fc1 = b_fc1_ref[...]
    b_head = b_head_ref[...]

    n_pad = Wout - (H + 3 * L)
    pad = jnp.zeros((B, n_pad), f32) if n_pad > 0 else None

    def step(t, carry):
        h, s = carry                                    # f32 carries (B,H), (B,L)

        # embedding = relu(Linear([state, action])); action part (+ b_lin) hoisted.
        x = emb_ref[t] + jnp.dot(bf16(s), w_lin_s, preferred_element_type=f32)
        x = jnp.maximum(x, 0.0)

        # GRUCell, PyTorch gate order (r, z, n); b_ih + b_hh pre-summed for r/z.
        gi = jnp.dot(bf16(x), w_ih, preferred_element_type=f32)
        gh = jnp.dot(bf16(h), w_hh, preferred_element_type=f32)
        pre_rz = gi[:, :2 * H] + gh[:, :2 * H] + b_rz
        r = jax.nn.sigmoid(pre_rz[:, :H])
        z = jax.nn.sigmoid(pre_rz[:, H:])
        n = jnp.tanh(gi[:, 2 * H:] + b_in + r * (gh[:, 2 * H:] + b_hn))
        h_new = (1.0 - z) * n + z * h

        # StateModel: Gaussian prior head, fused [mean | std] matmul.
        s1 = jnp.dot(bf16(h_new), w_fc1, preferred_element_type=f32) + b_fc1
        s1 = jnp.maximum(s1, 0.0)
        head = jnp.dot(bf16(s1), w_head, preferred_element_type=f32) + b_head
        mean = head[:, :L]
        std = jax.nn.softplus(head[:, L:]) + MIN_STD    # numerically stable
        s_new = mean + std * noise_ref[t]               # reparameterized sample

        # One lane-dense, unmasked (B, Wout) store per step: [h | s | mean | std | 0pad].
        pieces = [h_new, s_new, mean, std]
        if n_pad > 0:
            pieces.append(pad)
        out_ref[t] = jnp.concatenate(pieces, axis=-1)
        return h_new, s_new

    jax.lax.fori_loop(0, T, step, (h0_ref[...], s0_ref[...]), unroll=True)


# ---------------------------------------------------------------------------
# Parameter handling
# ---------------------------------------------------------------------------

def init_params(key, latent_size, action_size, hidden_size, dtype=jnp.float32):
    """Deterministic synthetic parameters (PyTorch-equivalent shapes, pre-transposed)."""
    ks = jax.random.split(key, 12)

    def w(k, shape, fan_in):
        bound = 1.0 / jnp.sqrt(fan_in)
        return jax.random.uniform(k, shape, dtype, -bound, bound)

    in_lin = latent_size + action_size
    return dict(
        w_lin=w(ks[0], (in_lin, hidden_size), in_lin),
        b_lin=w(ks[1], (1, hidden_size), in_lin),
        w_ih=w(ks[2], (hidden_size, 3 * hidden_size), hidden_size),
        b_ih=w(ks[3], (1, 3 * hidden_size), hidden_size),
        w_hh=w(ks[4], (hidden_size, 3 * hidden_size), hidden_size),
        b_hh=w(ks[5], (1, 3 * hidden_size), hidden_size),
        w_fc1=w(ks[6], (hidden_size, hidden_size), hidden_size),
        b_fc1=w(ks[7], (1, hidden_size), hidden_size),
        w_mean=w(ks[8], (hidden_size, latent_size), hidden_size),
        b_mean=w(ks[9], (1, latent_size), hidden_size),
        w_std=w(ks[10], (hidden_size, latent_size), hidden_size),
        b_std=w(ks[11], (1, latent_size), hidden_size),
    )


def pack_params(params, H, L):
    """True-width (no K padding) bf16 weights + pre-combined f32 biases."""
    bf = lambda x: x.astype(jnp.bfloat16)
    w_lin = params["w_lin"]                                     # (L+A, H)
    return dict(
        w_lin_s=bf(w_lin[:L]),                                  # (L, H)
        w_lin_a=bf(w_lin[L:]),                                  # (A, H) - hoisted matmul
        w_ih=bf(params["w_ih"]),                                # (H, 3H)
        w_hh=bf(params["w_hh"]),                                # (H, 3H)
        w_fc1=bf(params["w_fc1"]),                              # (H, H)
        w_head=bf(jnp.concatenate([params["w_mean"], params["w_std"]], axis=1)),  # (H, 2L)
        b_rz=(params["b_ih"][:, :2 * H] + params["b_hh"][:, :2 * H]).astype(jnp.float32),
        b_in=params["b_ih"][:, 2 * H:].astype(jnp.float32),
        b_hn=params["b_hh"][:, 2 * H:].astype(jnp.float32),
        b_fc1=params["b_fc1"].astype(jnp.float32),
        b_head=jnp.concatenate([params["b_mean"], params["b_std"]], axis=1).astype(jnp.float32),
        b_lin=params["b_lin"].astype(jnp.float32),
    )


# ---------------------------------------------------------------------------
# Pallas wrappers
# ---------------------------------------------------------------------------

def transition_rollout(hidden, state, actions, noise, params):
    """Run T recurrent TransitionModel steps in one pallas_call (single grid point).

    hidden: (B, H)   state: (B, L)   actions: (T, B, A)   noise: (T, B, L)
    Returns per-step (hidden, state_prior, mean, std), each with a leading T axis.
    """
    T, B, A = actions.shape
    H = hidden.shape[1]
    L = state.shape[1]
    Wout = _round_up(H + 3 * L, LANE)

    p = pack_params(params, H, L)

    # Hoisted, state-independent action embedding for all T steps: one bulk matmul
    # (bf16 operands, f32 accumulation) with b_lin folded in.
    emb = jnp.dot(actions.reshape(T * B, A).astype(jnp.bfloat16), p["w_lin_a"],
                  preferred_element_type=jnp.float32).reshape(T, B, H) + p["b_lin"]

    vmem = pl.BlockSpec(memory_space=pltpu.MemorySpace.VMEM)   # whole array, resident
    slab = pl.pallas_call(
        transition_kernel,
        out_shape=jax.ShapeDtypeStruct((T, B, Wout), jnp.float32),
        in_specs=[vmem] * 14,
        out_specs=vmem,
    )(emb,
      hidden.astype(jnp.float32), state.astype(jnp.float32), noise.astype(jnp.float32),
      p["w_lin_s"], p["w_ih"], p["w_hh"], p["w_fc1"], p["w_head"],
      p["b_rz"], p["b_in"], p["b_hn"], p["b_fc1"], p["b_head"])

    hid = slab[:, :, :H]
    st = slab[:, :, H:H + L]
    mean = slab[:, :, H + L:H + 2 * L]
    std = slab[:, :, H + 2 * L:H + 3 * L]
    return hid, st, mean, std


def transition_forward(hidden, state, action, noise, params):
    """Single-step forward matching TransitionModel.forward semantics."""
    h, s, m, sd = transition_rollout(hidden, state, action[None], noise[None], params)
    return h[0], s[0], m[0], sd[0]


# ---------------------------------------------------------------------------
# Pure-JAX reference
# ---------------------------------------------------------------------------

def reference_step(hidden, state, action, noise, params, matmul_dtype=None):
    """matmul_dtype=None -> full f32 / HIGHEST; jnp.bfloat16 -> same bf16-operand,
    f32-accumulate matmul policy as the kernel (element-wise math stays f32)."""
    H = hidden.shape[1]
    if matmul_dtype is None:
        dot = lambda a, b: jnp.dot(a, b, precision=jax.lax.Precision.HIGHEST)
    else:
        dot = lambda a, b: jnp.dot(a.astype(matmul_dtype), b.astype(matmul_dtype),
                                   preferred_element_type=jnp.float32)
    x = jnp.concatenate([state, action], axis=1)
    x = jnp.maximum(dot(x, params["w_lin"]) + params["b_lin"], 0.0)
    gi = dot(x, params["w_ih"]) + params["b_ih"]
    gh = dot(hidden, params["w_hh"]) + params["b_hh"]
    r = jax.nn.sigmoid(gi[:, :H] + gh[:, :H])
    z = jax.nn.sigmoid(gi[:, H:2 * H] + gh[:, H:2 * H])
    n = jnp.tanh(gi[:, 2 * H:] + r * gh[:, 2 * H:])
    h_new = (1.0 - z) * n + z * hidden
    s1 = jnp.maximum(dot(h_new, params["w_fc1"]) + params["b_fc1"], 0.0)
    mean = dot(s1, params["w_mean"]) + params["b_mean"]
    std = jax.nn.softplus(dot(s1, params["w_std"]) + params["b_std"]) + MIN_STD
    return h_new, mean + std * noise, mean, std


if __name__ == "__main__":
    B = 8       # batch_size (stack more rollouts here for real throughput)
    H = 32      # deterministic_state_size
    L = 16      # stochastic_state_size
    A = 4       # action_size
    T = 8       # rollout length (amortizes launch + weight DMA)

    key = jax.random.PRNGKey(0)
    k_p, k_h, k_s, k_a, k_n = jax.random.split(key, 5)

    params = init_params(k_p, L, A, H)
    hidden = jax.random.normal(k_h, (B, H), jnp.float32)
    state = jax.random.normal(k_s, (B, L), jnp.float32)
    actions = jax.random.normal(k_a, (T, B, A), jnp.float32)
    noise = jax.random.normal(k_n, (T, B, L), jnp.float32)

    fwd = jax.jit(transition_forward)
    rollout = jax.jit(transition_rollout)

    # --- single-step forward (module semantics) -----------------------------
    step_out = jax.block_until_ready(fwd(hidden, state, actions[0], noise[0], params))
    ref_bf16 = reference_step(hidden, state, actions[0], noise[0], params,
                              matmul_dtype=jnp.bfloat16)
    ref_f32 = reference_step(hidden, state, actions[0], noise[0], params)
    for got, tight, loose in zip(step_out, ref_bf16, ref_f32):
        assert got.shape == loose.shape
        # tight: identical matmul-precision policy as the kernel
        assert jnp.allclose(got, tight, atol=2e-3, rtol=2e-3), "single-step mismatch (bf16 ref)"
        # loose: full-f32 module semantics (bf16 matmul operands is an intentional choice)
        assert jnp.allclose(got, loose, atol=5e-2, rtol=5e-2), "single-step mismatch (f32 ref)"

    # --- T-step rollout in one pallas_call / one grid point -----------------
    roll = jax.block_until_ready(rollout(hidden, state, actions, noise, params))
    h_ref, s_ref = hidden, state
    for t in range(T):
        h_ref, s_ref, m_ref, sd_ref = reference_step(
            h_ref, s_ref, actions[t], noise[t], params, matmul_dtype=jnp.bfloat16)
        for got, want in zip((roll[0][t], roll[1][t], roll[2][t], roll[3][t]),
                             (h_ref, s_ref, m_ref, sd_ref)):
            assert got.shape == want.shape
            assert jnp.allclose(got, want, atol=2e-3, rtol=2e-3), f"rollout mismatch @t={t}"

    print("KERNEL_OK")
</pallas_src>

<mosaic_0001>
module attributes {stable_mosaic.version = 11 : i64} {
  func.func @transition_kernel(%arg0: memref<1x8x32xf32, #tpu.memory_space<vmem>>, %arg1: memref<8x32xf32, #tpu.memory_space<vmem>>, %arg2: memref<8x16xf32, #tpu.memory_space<vmem>>, %arg3: memref<1x8x16xf32, #tpu.memory_space<vmem>>, %arg4: memref<16x32xbf16, #tpu.memory_space<vmem>>, %arg5: memref<32x96xbf16, #tpu.memory_space<vmem>>, %arg6: memref<32x96xbf16, #tpu.memory_space<vmem>>, %arg7: memref<32x32xbf16, #tpu.memory_space<vmem>>, %arg8: memref<32x32xbf16, #tpu.memory_space<vmem>>, %arg9: memref<1x64xf32, #tpu.memory_space<vmem>>, %arg10: memref<1x32xf32, #tpu.memory_space<vmem>>, %arg11: memref<1x32xf32, #tpu.memory_space<vmem>>, %arg12: memref<1x32xf32, #tpu.memory_space<vmem>>, %arg13: memref<1x32xf32, #tpu.memory_space<vmem>>, %arg14: memref<1x8x128xf32, #tpu.memory_space<vmem>>) attributes {dimension_semantics = [], scalar_prefetch = 0 : i64, scratch_operands = 0 : i64, tpu.core_type = #tpu.core_type<tc>} {
    %c0 = arith.constant 0 : index
    %c0_0 = arith.constant 0 : index
    %0 = vector.load %arg4[%c0, %c0_0] : memref<16x32xbf16, #tpu.memory_space<vmem>>, vector<16x32xbf16>
    %c0_1 = arith.constant 0 : index
    %c0_2 = arith.constant 0 : index
    %1 = vector.load %arg5[%c0_1, %c0_2] : memref<32x96xbf16, #tpu.memory_space<vmem>>, vector<32x96xbf16>
    %c0_3 = arith.constant 0 : index
    %c0_4 = arith.constant 0 : index
    %2 = vector.load %arg6[%c0_3, %c0_4] : memref<32x96xbf16, #tpu.memory_space<vmem>>, vector<32x96xbf16>
    %c0_5 = arith.constant 0 : index
    %c0_6 = arith.constant 0 : index
    %3 = vector.load %arg7[%c0_5, %c0_6] : memref<32x32xbf16, #tpu.memory_space<vmem>>, vector<32x32xbf16>
    %c0_7 = arith.constant 0 : index
    %c0_8 = arith.constant 0 : index
    %4 = vector.load %arg8[%c0_7, %c0_8] : memref<32x32xbf16, #tpu.memory_space<vmem>>, vector<32x32xbf16>
    %c0_9 = arith.constant 0 : index
    %c0_10 = arith.constant 0 : index
    %5 = vector.load %arg9[%c0_9, %c0_10] : memref<1x64xf32, #tpu.memory_space<vmem>>, vector<1x64xf32>
    %c0_11 = arith.constant 0 : index
    %c0_12 = arith.constant 0 : index
    %6 = vector.load %arg10[%c0_11, %c0_12] : memref<1x32xf32, #tpu.memory_space<vmem>>, vector<1x32xf32>
    %c0_13 = arith.constant 0 : index
    %c0_14 = arith.constant 0 : index
    %7 = vector.load %arg11[%c0_13, %c0_14] : memref<1x32xf32, #tpu.memory_space<vmem>>, vector<1x32xf32>
    %c0_15 = arith.constant 0 : index
    %c0_16 = arith.constant 0 : index
    %8 = vector.load %arg12[%c0_15, %c0_16] : memref<1x32xf32, #tpu.memory_space<vmem>>, vector<1x32xf32>
    %c0_17 = arith.constant 0 : index
    %c0_18 = arith.constant 0 : index
    %9 = vector.load %arg13[%c0_17, %c0_18] : memref<1x32xf32, #tpu.memory_space<vmem>>, vector<1x32xf32>
    %cst = arith.constant 0.000000e+00 : f32
    %10 = vector.broadcast %cst : f32 to vector<8x48xf32>
    %c0_19 = arith.constant 0 : index
    %c0_20 = arith.constant 0 : index
    %11 = vector.load %arg1[%c0_19, %c0_20] : memref<8x32xf32, #tpu.memory_space<vmem>>, vector<8x32xf32>
    %c0_21 = arith.constant 0 : index
    %c0_22 = arith.constant 0 : index
    %12 = vector.load %arg2[%c0_21, %c0_22] : memref<8x16xf32, #tpu.memory_space<vmem>>, vector<8x16xf32>
    %c0_i32 = arith.constant 0 : i32
    %13 = arith.index_cast %c0_i32 : i32 to index
    %c0_23 = arith.constant 0 : index
    %c0_24 = arith.constant 0 : index
    %14 = vector.load %arg0[%13, %c0_23, %c0_24] : memref<1x8x32xf32, #tpu.memory_space<vmem>>, vector<1x8x32xf32>
    %15 = vector.shape_cast %14 : vector<1x8x32xf32> to vector<8x32xf32>
    %16 = arith.truncf %12 : vector<8x16xf32> to vector<8x16xbf16>
    %cst_25 = arith.constant dense<0.000000e+00> : vector<8x32xf32>
    %17 = tpu.matmul %16, %0, %cst_25 {dimension_numbers = #tpu.dot_dimension_numbers<[1], [0], [0], [1], [0, 0, 1, 1], [], []>} : vector<8x16xbf16>, vector<16x32xbf16>, vector<8x32xf32> -> vector<8x32xf32>
    %18 = arith.addf %15, %17 : vector<8x32xf32>
    %cst_26 = arith.constant 0.000000e+00 : f32
    %19 = vector.broadcast %cst_26 : f32 to vector<8x32xf32>
    %20 = arith.maximumf %18, %19 : vector<8x32xf32>
    %21 = arith.truncf %20 : vector<8x32xf32> to vector<8x32xbf16>
    %cst_27 = arith.constant dense<0.000000e+00> : vector<8x96xf32>
    %22 = tpu.matmul %21, %1, %cst_27 {dimension_numbers = #tpu.dot_dimension_numbers<[1], [0], [0], [1], [0, 0, 1, 1], [], []>} : vector<8x32xbf16>, vector<32x96xbf16>, vector<8x96xf32> -> vector<8x96xf32>
    %23 = arith.truncf %11 : vector<8x32xf32> to vector<8x32xbf16>
    %cst_28 = arith.constant dense<0.000000e+00> : vector<8x96xf32>
    %24 = tpu.matmul %23, %2, %cst_28 {dimension_numbers = #tpu.dot_dimension_numbers<[1], [0], [0], [1], [0, 0, 1, 1], [], []>} : vector<8x32xbf16>, vector<32x96xbf16>, vector<8x96xf32> -> vector<8x96xf32>
    %25 = vector.extract_strided_slice %22 {offsets = [0, 0], sizes = [8, 64], strides = [1, 1]} : vector<8x96xf32> to vector<8x64xf32>
    %26 = vector.extract_strided_slice %24 {offsets = [0, 0], sizes = [8, 64], strides = [1, 1]} : vector<8x96xf32> to vector<8x64xf32>
    %27 = arith.addf %25, %26 : vector<8x64xf32>
    %28 = vector.broadcast %5 : vector<1x64xf32> to vector<8x64xf32>
    %29 = arith.addf %27, %28 : vector<8x64xf32>
    %30 = vector.extract_strided_slice %29 {offsets = [0, 0], sizes = [8, 32], strides = [1, 1]} : vector<8x64xf32> to vector<8x32xf32>
    %31 = arith.negf %30 : vector<8x32xf32>
    %32 = math.exp %31 : vector<8x32xf32>
    %cst_29 = arith.constant 1.000000e+00 : f32
    %33 = vector.broadcast %cst_29 : f32 to vector<8x32xf32>
    %34 = arith.addf %33, %32 : vector<8x32xf32>
    %35 = arith.divf %33, %34 : vector<8x32xf32>
    %36 = vector.extract_strided_slice %29 {offsets = [0, 32], sizes = [8, 32], strides = [1, 1]} : vector<8x64xf32> to vector<8x32xf32>
    %37 = arith.negf %36 : vector<8x32xf32>
    %38 = math.exp %37 : vector<8x32xf32>
    %cst_30 = arith.constant 1.000000e+00 : f32
    %39 = vector.broadcast %cst_30 : f32 to vector<8x32xf32>
    %40 = arith.addf %39, %38 : vector<8x32xf32>
    %41 = arith.divf %39, %40 : vector<8x32xf32>
    %42 = vector.extract_strided_slice %22 {offsets = [0, 64], sizes = [8, 32], strides = [1, 1]} : vector<8x96xf32> to vector<8x32xf32>
    %43 = vector.broadcast %6 : vector<1x32xf32> to vector<8x32xf32>
    %44 = arith.addf %42, %43 : vector<8x32xf32>
    %45 = vector.extract_strided_slice %24 {offsets = [0, 64], sizes = [8, 32], strides = [1, 1]} : vector<8x96xf32> to vector<8x32xf32>
    %46 = vector.broadcast %7 : vector<1x32xf32> to vector<8x32xf32>
    %47 = arith.addf %45, %46 : vector<8x32xf32>
    %48 = arith.mulf %35, %47 : vector<8x32xf32>
    %49 = arith.addf %44, %48 : vector<8x32xf32>
    %50 = math.tanh %49 : vector<8x32xf32>
    %cst_31 = arith.constant 1.000000e+00 : f32
    %51 = vector.broadcast %cst_31 : f32 to vector<8x32xf32>
    %52 = arith.subf %51, %41 : vector<8x32xf32>
    %53 = arith.mulf %52, %50 : vector<8x32xf32>
    %54 = arith.mulf %41, %11 : vector<8x32xf32>
    %55 = arith.addf %53, %54 : vector<8x32xf32>
    %56 = arith.truncf %55 : vector<8x32xf32> to vector<8x32xbf16>
    %cst_32 = arith.constant dense<0.000000e+00> : vector<8x32xf32>
    %57 = tpu.matmul %56, %3, %cst_32 {dimension_numbers = #tpu.dot_dimension_numbers<[1], [0], [0], [1], [0, 0, 1, 1], [], []>} : vector<8x32xbf16>, vector<32x32xbf16>, vector<8x32xf32> -> vector<8x32xf32>
    %58 = vector.broadcast %8 : vector<1x32xf32> to vector<8x32xf32>
    %59 = arith.addf %57, %58 : vector<8x32xf32>
    %cst_33 = arith.constant 0.000000e+00 : f32
    %60 = vector.broadcast %cst_33 : f32 to vector<8x32xf32>
    %61 = arith.maximumf %59, %60 : vector<8x32xf32>
    %62 = arith.truncf %61 : vector<8x32xf32> to vector<8x32xbf16>
    %cst_34 = arith.constant dense<0.000000e+00> : vector<8x32xf32>
    %63 = tpu.matmul %62, %4, %cst_34 {dimension_numbers = #tpu.dot_dimension_numbers<[1], [0], [0], [1], [0, 0, 1, 1], [], []>} : vector<8x32xbf16>, vector<32x32xbf16>, vector<8x32xf32> -> vector<8x32xf32>
    %64 = vector.broadcast %9 : vector<1x32xf32> to vector<8x32xf32>
    %65 = arith.addf %63, %64 : vector<8x32xf32>
    %66 = vector.extract_strided_slice %65 {offsets = [0, 0], sizes = [8, 16], strides = [1, 1]} : vector<8x32xf32> to vector<8x16xf32>
    %67 = vector.extract_strided_slice %65 {offsets = [0, 16], sizes = [8, 16], strides = [1, 1]} : vector<8x32xf32> to vector<8x16xf32>
    %cst_35 = arith.constant 0.000000e+00 : f32
    %68 = vector.broadcast %cst_35 : f32 to vector<8x16xf32>
    %69 = arith.maximumf %67, %68 : vector<8x16xf32>
    %70 = vector.broadcast %cst_35 : f32 to vector<8x16xf32>
    %71 = arith.subf %67, %70 : vector<8x16xf32>
    %72 = arith.cmpf one, %71, %71 : vector<8x16xf32>
    %73 = vector.broadcast %cst_35 : f32 to vector<8x16xf32>
    %74 = arith.addf %67, %73 : vector<8x16xf32>
    %75 = math.absf %71 : vector<8x16xf32>
    %cst_36 = arith.constant 0.000000e+00 : f32
    %76 = vector.broadcast %cst_36 : f32 to vector<8x16xf32>
    %77 = arith.subf %76, %75 : vector<8x16xf32>
    %78 = math.exp %77 : vector<8x16xf32>
    %79 = math.log1p %78 : vector<8x16xf32>
    %80 = arith.addf %69, %79 : vector<8x16xf32>
    %81 = arith.select %72, %74, %80 : vector<8x16xi1>, vector<8x16xf32>
    %cst_37 = arith.constant 1.000000e-01 : f32
    %82 = vector.broadcast %cst_37 : f32 to vector<8x16xf32>
    %83 = arith.addf %81, %82 : vector<8x16xf32>
    %84 = arith.index_cast %c0_i32 : i32 to index
    %c0_38 = arith.constant 0 : index
    %c0_39 = arith.constant 0 : index
    %85 = vector.load %arg3[%84, %c0_38, %c0_39] : memref<1x8x16xf32, #tpu.memory_space<vmem>>, vector<1x8x16xf32>
    %86 = vector.shape_cast %85 : vector<1x8x16xf32> to vector<8x16xf32>
    %87 = arith.mulf %83, %86 : vector<8x16xf32>
    %88 = arith.addf %66, %87 : vector<8x16xf32>
    %89 = tpu.concatenate %55, %88, %66, %83, %10 in 1 : vector<8x32xf32>, vector<8x16xf32>, vector<8x16xf32>, vector<8x16xf32>, vector<8x48xf32> -> vector<8x128xf32>
    %90 = arith.index_cast %c0_i32 : i32 to index
    %c0_40 = arith.constant 0 : index
    %c0_41 = arith.constant 0 : index
    %91 = vector.load %arg14[%90, %c0_40, %c0_41] : memref<1x8x128xf32, #tpu.memory_space<vmem>>, vector<1x8x128xf32>
    %92 = vector.shape_cast %91 : vector<1x8x128xf32> to vector<8x128xf32>
    %93 = vector.shape_cast %89 : vector<8x128xf32> to vector<1x8x128xf32>
    tpu.vector_store %arg14[%90, %c0_40, %c0_41], %93 {strides = array<i32>} : memref<1x8x128xf32, #tpu.memory_space<vmem>>, vector<1x8x128xf32>,
    %c1_i32 = arith.constant 1 : i32
    return
  }
}

</mosaic_0001>

<llo_original>
// kernel: transition_forward.1
$region0: #{transition_forward.1}
  #allocation0 [shape = 'u32[]', space=smem, size = 0x4, offset = 0x4, fixed_abs, tag = 'smem constant byte address 0x4 - core index']
  #allocation1 [shape = 'u32[72,128]{1,0:T(1,128)}', space=vmem, size = 0x9000, scoped, tag = 'internal scratch']
  %s0 = inlined_call_operand.vmem [shape: f32[1,8,32], index: 0, kind: input, shape index: {}]
  %s1 = inlined_call_operand.vmem [shape: f32[8,32], index: 1, kind: input, shape index: {}]
  %s2 = inlined_call_operand.vmem [shape: f32[8,16], index: 2, kind: input, shape index: {}]
  %s3 = inlined_call_operand.vmem [shape: f32[1,8,16], index: 3, kind: input, shape index: {}]
  %s4 = inlined_call_operand.vmem [shape: bf16[16,32], index: 4, kind: input, shape index: {}]
  %s5 = inlined_call_operand.vmem [shape: bf16[32,96], index: 5, kind: input, shape index: {}]
  %s6 = inlined_call_operand.vmem [shape: bf16[32,96], index: 6, kind: input, shape index: {}]
  %s7 = inlined_call_operand.vmem [shape: bf16[32,32], index: 7, kind: input, shape index: {}]
  %s8 = inlined_call_operand.vmem [shape: bf16[32,32], index: 8, kind: input, shape index: {}]
  %s9 = inlined_call_operand.vmem [shape: f32[1,64], index: 9, kind: input, shape index: {}]
  %s10 = inlined_call_operand.vmem [shape: f32[1,32], index: 10, kind: input, shape index: {}]
  %s11 = inlined_call_operand.vmem [shape: f32[1,32], index: 11, kind: input, shape index: {}]
  %s12 = inlined_call_operand.vmem [shape: f32[1,32], index: 12, kind: input, shape index: {}]
  %s13 = inlined_call_operand.vmem [shape: f32[1,32], index: 13, kind: input, shape index: {}]
  %s14 = inlined_call_operand.vmem [shape: f32[1,8,128], index: 14, kind: output, shape index: {}]
  %s15 = sld [smem:[#allocation0]]
  $region66: #{transition_forward.1} parent=0
    _
  %s17 = ssub.s32 1, %s15
  %s18 = scalar_select 0, %s17, %s15
  // Predicated region
  $region2: #{transition_forward.1} parent=0 // pred_check
    _
  $region3: #{transition_forward.1} parent=0 // pred_check_branch
    %20 = sbr.rel (0) target = $region5
  $region4: #{transition_forward.1} parent=0 // pred_region
    _
  $region5: #{transition_forward.1} parent=0 // pred_fallthru
    _
  // Predicated region
  $region6: #{transition_forward.1} parent=0 // pred_check
    _
  $region7: #{transition_forward.1} parent=0 // pred_check_branch
    %22 = sbr.rel (0) target = $region9
  $region8: #{transition_forward.1} parent=0 // pred_region
    _
  $region9: #{transition_forward.1} parent=0 // pred_fallthru
    _
  // Predicated region
  $region10: #{transition_forward.1} parent=0 // pred_check
    _
  $region11: #{transition_forward.1} parent=0 // pred_check_branch
    %24 = sbr.rel (0) target = $region13
  $region12: #{transition_forward.1} parent=0 // pred_region
    _
  $region13: #{transition_forward.1} parent=0 // pred_fallthru
    _
  // Predicated region
  $region14: #{transition_forward.1} parent=0 // pred_check
    _
  $region15: #{transition_forward.1} parent=0 // pred_check_branch
    %26 = sbr.rel (0) target = $region17
  $region16: #{transition_forward.1} parent=0 // pred_region
    _
  $region17: #{transition_forward.1} parent=0 // pred_fallthru
    _
  // Predicated region
  $region18: #{transition_forward.1} parent=0 // pred_check
    _
  $region19: #{transition_forward.1} parent=0 // pred_check_branch
    %28 = sbr.rel (0) target = $region21
  $region20: #{transition_forward.1} parent=0 // pred_region
    _
  $region21: #{transition_forward.1} parent=0 // pred_fallthru
    _
  // Predicated region
  $region22: #{transition_forward.1} parent=0 // pred_check
    _
  $region23: #{transition_forward.1} parent=0 // pred_check_branch
    %30 = sbr.rel (0) target = $region25
  $region24: #{transition_forward.1} parent=0 // pred_region
    _
  $region25: #{transition_forward.1} parent=0 // pred_fallthru
    _
  // Predicated region
  $region26: #{transition_forward.1} parent=0 // pred_check
    _
  $region27: #{transition_forward.1} parent=0 // pred_check_branch
    %32 = sbr.rel (0) target = $region29
  $region28: #{transition_forward.1} parent=0 // pred_region
    _
  $region29: #{transition_forward.1} parent=0 // pred_fallthru
    _
  // Predicated region
  $region30: #{transition_forward.1} parent=0 // pred_check
    _
  $region31: #{transition_forward.1} parent=0 // pred_check_branch
    %34 = sbr.rel (0) target = $region33
  $region32: #{transition_forward.1} parent=0 // pred_region
    _
  $region33: #{transition_forward.1} parent=0 // pred_fallthru
    _
  // Predicated region
  $region34: #{transition_forward.1} parent=0 // pred_check
    _
  $region35: #{transition_forward.1} parent=0 // pred_check_branch
    %36 = sbr.rel (0) target = $region37
  $region36: #{transition_forward.1} parent=0 // pred_region
    _
  $region37: #{transition_forward.1} parent=0 // pred_fallthru
    _
  // Predicated region
  $region38: #{transition_forward.1} parent=0 // pred_check
    _
  $region39: #{transition_forward.1} parent=0 // pred_check_branch
    %38 = sbr.rel (0) target = $region41
  $region40: #{transition_forward.1} parent=0 // pred_region
    _
  $region41: #{transition_forward.1} parent=0 // pred_fallthru
    _
  // Predicated region
  $region42: #{transition_forward.1} parent=0 // pred_check
    _
  $region43: #{transition_forward.1} parent=0 // pred_check_branch
    %40 = sbr.rel (0) target = $region45
  $region44: #{transition_forward.1} parent=0 // pred_region
    _
  $region45: #{transition_forward.1} parent=0 // pred_fallthru
    _
  // Predicated region
  $region46: #{transition_forward.1} parent=0 // pred_check
    _
  $region47: #{transition_forward.1} parent=0 // pred_check_branch
    %42 = sbr.rel (0) target = $region49
  $region48: #{transition_forward.1} parent=0 // pred_region
    _
  $region49: #{transition_forward.1} parent=0 // pred_fallthru
    _
  // Predicated region
  $region50: #{transition_forward.1} parent=0 // pred_check
    _
  $region51: #{transition_forward.1} parent=0 // pred_check_branch
    %44 = sbr.rel (0) target = $region53
  $region52: #{transition_forward.1} parent=0 // pred_region
    _
  $region53: #{transition_forward.1} parent=0 // pred_fallthru
    _
  // Predicated region
  $region54: #{transition_forward.1} parent=0 // pred_check
    _
  $region55: #{transition_forward.1} parent=0 // pred_check_branch
    %46 = sbr.rel (0) target = $region57
  $region56: #{transition_forward.1} parent=0 // pred_region
    _
  $region57: #{transition_forward.1} parent=0 // pred_fallthru
    _
  %v48 = vld [vmem:[%s4] sm:$0xf]
  %v49 = vld [vmem:[%s4 + $0x4] sm:$0xf]
  %v50 = vld [vmem:[%s5] sm:$0xf]
  %v51 = vld [vmem:[%s5 + $0x4] sm:$0xf]
  %v52 = vld [vmem:[%s5 + $0x8] sm:$0xf]
  %v53 = vld [vmem:[%s5 + $0xc] sm:$0xf]
  %v54 = vld [vmem:[%s6] sm:$0xf]
  %v55 = vld [vmem:[%s6 + $0x4] sm:$0xf]
  %v56 = vld [vmem:[%s6 + $0x8] sm:$0xf]
  %v57 = vld [vmem:[%s6 + $0xc] sm:$0xf]
  %v58 = vld [vmem:[%s7] sm:$0xf]
  %v59 = vld [vmem:[%s7 + $0x4] sm:$0xf]
  %v60 = vld [vmem:[%s7 + $0x8] sm:$0xf]
  %v61 = vld [vmem:[%s7 + $0xc] sm:$0xf]
  %v62 = vld [vmem:[%s8] sm:$0xf]
  %v63 = vld [vmem:[%s8 + $0x4] sm:$0xf]
  %v64 = vld [vmem:[%s8 + $0x8] sm:$0xf]
  %v65 = vld [vmem:[%s8 + $0xc] sm:$0xf]
  %v66 = vld [vmem:[%s9] sm:$0x1]
  %v67 = vld [vmem:[%s10] sm:$0x1]
  %v68 = vld [vmem:[%s11] sm:$0x1]
  %v69 = vld [vmem:[%s12] sm:$0x1]
  %v70 = vld [vmem:[%s13] sm:$0x1]
  %v71 = vld [vmem:[%s1] sm:$0xff]
  %v72 = vld [vmem:[%s2] sm:$0xff]
  %v73 = vld [vmem:[%s0] sm:$0xff]
  %v74 = vpack.c.bf16 %v72, %v72
  %v77 = vunpack.c.l.b16 %v48
  %v78 = vunpack.c.l.b16 %v49
  %v79 = vpack.c.b16 %v78, %v77
  %vm81 = vcmask 130048
  %v83 = vsel %vm81, %v74, 0
  %85 = vmatpush.bf16.msra.mxu0 0
  %86 = vmatpush.bf16.msra.mxu0 0
  %87 = vmatpush.bf16.msra.mxu0 0
  %88 = vmatpush.bf16.msra.mxu0 0
  %89 = vmatpush.bf16.msra.mxu0 0
  %90 = vmatpush.bf16.msra.mxu0 0
  %91 = vmatpush.bf16.msra.mxu0 0
  %92 = vmatpush.bf16.msra.mxu0 %v79
  %93 = vmatmul.bf16.gmra.mxu0 %v83
  %v94 = vpop.f32.mrf.mxu0
  %v95 = vadd.f32 0.0, %v94
  %v96 = vpop.f32.mrf.mxu0
  %97 = vdwg.mxu0
  %v98 = vadd.f32 %v73, %v95
  %v99 = vmax.f32 %v98, 0.0
  %v100 = vpack.c.bf16 %v99, %v99
  %v105 = vunpack.c.l.b16 %v50
  %v106 = vunpack.c.l.b16 %v51
  %v107 = vunpack.c.l.b16 %v52
  %v108 = vunpack.c.l.b16 %v53
  %v109 = vpack.c.b16 %v106, %v105
  %v110 = vpack.c.b16 %v108, %v107
  %vm113 = vcmask 261120
  %v115 = vsel %vm113, %v100, 0
  %117 = vmatpush.bf16.msra.mxu0 0
  %118 = vmatpush.bf16.msra.mxu0 0
  %119 = vmatpush.bf16.msra.mxu0 0
  %120 = vmatpush.bf16.msra.mxu0 0
  %121 = vmatpush.bf16.msra.mxu0 0
  %122 = vmatpush.bf16.msra.mxu0 0
  %123 = vmatpush.bf16.msra.mxu0 %v110
  %124 = vmatpush.bf16.msra.mxu0 %v109
  %125 = vmatmul.bf16.gmra.mxu0 %v115
  %v126 = vpop.f32.mrf.mxu0
  %v127 = vadd.f32 0.0, %v126
  %v128 = vpop.f32.mrf.mxu0
  %129 = vdwg.mxu0
  %v130 = vpack.c.bf16 %v71, %v71
  %v135 = vunpack.c.l.b16 %v54
  %v136 = vunpack.c.l.b16 %v55
  %v137 = vunpack.c.l.b16 %v56
  %v138 = vunpack.c.l.b16 %v57
  %v139 = vpack.c.b16 %v136, %v135
  %v140 = vpack.c.b16 %v138, %v137
  %v144 = vsel %vm113, %v130, 0
  %146 = vmatpush.bf16.msra.mxu0 0
  %147 = vmatpush.bf16.msra.mxu0 0
  %148 = vmatpush.bf16.msra.mxu0 0
  %149 = vmatpush.bf16.msra.mxu0 0
  %150 = vmatpush.bf16.msra.mxu0 0
  %151 = vmatpush.bf16.msra.mxu0 0
  %152 = vmatpush.bf16.msra.mxu0 %v140
  %153 = vmatpush.bf16.msra.mxu0 %v139
  %154 = vmatmul.bf16.gmra.mxu0 %v144
  %v155 = vpop.f32.mrf.mxu0
  %v156 = vadd.f32 0.0, %v155
  %v157 = vpop.f32.mrf.mxu0
  %158 = vdwg.mxu0
  %v159 = vadd.f32 %v127, %v156
  %v161 = vperm.slane %v66, 0
  %v163 = vadd.f32 %v159, %v161
  %v164 = vxor.u32 %v163, 2147483648
  %v165 = vmul.f32 %v164, 1.442695
  %v166 = vpow.pop %v165
  %v167 = vadd.f32 %v166, 1.0
  %v168 = vrcp.pop %v167
  %v169 = vmul.f32 %v167, %v168
  %v170 = vsub.f32 1.0, %v169
  %v171 = vmul.f32 %v168, %v170
  %v172 = vadd.f32 %v168, %v171
  %vm173 = vweird.f32 %v167
  %vm174 = vweird.f32 %v168
  %vm175 = vmor %vm173, %vm174
  %v176 = vsel %vm175, %v168, %v172
  %v177 = vand.u32 2147483647, %v167
  %vm178 = vcmp.eq.f32.partialorder %v177, 8.507059e+37
  %v179 = vand.u32 %v167, 2147483648
  %v180 = vor.u32 1.1754944e-38, %v179
  %v181 = vsel %vm178, %v180, %v176
  %v182 = vmul.f32 1.0, %v181
  %v184 = vperm.slane %v67, 0
  %185 = vrot.lane.b32.xlu0 %v184, 64
  %v186 = vpop.permute.xlu0 %185
  %v188 = vadd.f32 %v127, %v186
  %v190 = vperm.slane %v68, 0
  %191 = vrot.lane.b32.xlu0 %v190, 64
  %v192 = vpop.permute.xlu0 %191
  %v194 = vadd.f32 %v156, %v192
  %196 = vrot.lane.b32.xlu0 %v194, 64
  %v197 = vpop.permute.xlu0 %196
  %v199 = vmul.f32 %v182, %v197
  %201 = vrot.lane.b32.xlu0 %v199, 64
  %v202 = vpop.permute.xlu0 %201
  %v204 = vadd.f32 %v188, %v202
  %v205 = vtanh.pop %v204
  %v206 = vsub.f32 1.0, %v182
  %208 = vrot.lane.b32.xlu0 %v205, 96
  %v209 = vpop.permute.xlu0 %208
  %v211 = vmul.f32 %v206, %v209
  %213 = vrot.lane.b32.xlu0 %v71, 32
  %v214 = vpop.permute.xlu0 %213
  %v216 = vmul.f32 %v182, %v214
  %v217 = vadd.f32 %v211, %v216
  %v218 = vpack.c.bf16 %v217, %v217
  %v220 = vperm.slane %v69, 0
  %223 = vrot.lane.b32.xlu0 %v218, 96
  %v224 = vpop.permute.xlu0 %223
  %v229 = vunpack.c.l.b16 %v58
  %v230 = vunpack.c.l.b16 %v59
  %v231 = vunpack.c.l.b16 %v60
  %v232 = vunpack.c.l.b16 %v61
  %v233 = vpack.c.b16 %v230, %v229
  %v234 = vpack.c.b16 %v232, %v231
  %v238 = vsel %vm113, %v224, 0
  %240 = vmatpush.bf16.msra.mxu0 0
  %241 = vmatpush.bf16.msra.mxu0 0
  %242 = vmatpush.bf16.msra.mxu0 0
  %243 = vmatpush.bf16.msra.mxu0 0
  %244 = vmatpush.bf16.msra.mxu0 0
  %245 = vmatpush.bf16.msra.mxu0 0
  %246 = vmatpush.bf16.msra.mxu0 %v234
  %247 = vmatpush.bf16.msra.mxu0 %v233
  %248 = vmatmul.bf16.gmra.mxu0 %v238
  %v249 = vpop.f32.mrf.mxu0
  %v250 = vadd.f32 %v220, %v249
  %v251 = vpop.f32.mrf.mxu0
  %252 = vdwg.mxu0
  %v253 = vmax.f32 %v250, 0.0
  %v254 = vpack.c.bf16 %v253, %v253
  %v256 = vperm.slane %v70, 0
  %v262 = vunpack.c.l.b16 %v62
  %v263 = vunpack.c.l.b16 %v63
  %v264 = vunpack.c.l.b16 %v64
  %v265 = vunpack.c.l.b16 %v65
  %v266 = vpack.c.b16 %v263, %v262
  %v267 = vpack.c.b16 %v265, %v264
  %v271 = vsel %vm113, %v254, 0
  %273 = vmatpush.bf16.msra.mxu0 0
  %274 = vmatpush.bf16.msra.mxu0 0
  %275 = vmatpush.bf16.msra.mxu0 0
  %276 = vmatpush.bf16.msra.mxu0 0
  %277 = vmatpush.bf16.msra.mxu0 0
  %278 = vmatpush.bf16.msra.mxu0 0
  %279 = vmatpush.bf16.msra.mxu0 %v267
  %280 = vmatpush.bf16.msra.mxu0 %v266
  %281 = vmatmul.bf16.gmra.mxu0 %v271
  %v282 = vpop.f32.mrf.mxu0
  %v283 = vadd.f32 %v256, %v282
  %v284 = vpop.f32.mrf.mxu0
  %285 = vdwg.mxu0
  %v286 = vmax.f32 %v283, 0.0
  %vm287 = vcmp.ne.f32.partialorder %v283, %v283
  %v288 = vadd.f32 %v283, 0.0
  %v289 = vand.u32 2147483647, %v283
  %v290 = vsub.f32 0.0, %v289
  %v291 = vmul.f32 %v290, 1.442695
  %v292 = vpow.pop %v291
  %v293 = vadd.f32 %v292, 1.0
  %v294 = vlog2.pop %v293
  %v295 = vmul.f32 %v294, 0.6931472
  %v296 = vmul.f32 -0.5, %v292
  %v297 = vadd.f32 %v296, 1.0
  %v298 = vmul.f32 %v297, %v292
  %v299 = vand.u32 2147483647, %v292
  %vm300 = vcmp.lt.f32.partialorder %v299, 0.0004427343
  %v301 = vsel %vm300, %v298, %v295
  %v302 = vadd.f32 %v286, %v301
  %v303 = vsel %vm287, %v288, %v302
  %v304 = vadd.f32 %v303, 0.1
  %v305 = vld [vmem:[%s3] sm:$0xff]
  %307 = vrot.lane.b32.xlu0 %v305, 16
  %v308 = vpop.permute.xlu0 %307
  %v310 = vmul.f32 %v304, %v308
  %312 = vrot.lane.b32.xlu0 %v310, 112
  %v313 = vpop.permute.xlu0 %312
  %v315 = vadd.f32 %v283, %v313
  %317 = vrot.lane.b32.xlu0 %v217, 96
  %v318 = vpop.permute.xlu0 %317
  %321 = vrot.lane.b32.xlu0 %v315, 32
  %v322 = vpop.permute.xlu0 %321
  %325 = vrot.lane.b32.xlu0 %v283, 48
  %v326 = vpop.permute.xlu0 %325
  %329 = vrot.lane.b32.xlu0 %v304, 48
  %v330 = vpop.permute.xlu0 %329
  %v332 = vsel %vm113, %v318, %v322
  %vm333 = vcmask 392192
  %v334 = vsel %vm333, %v332, %v326
  %vm335 = vcmask 523264
  %v336 = vsel %vm335, %v334, %v330
  %vm337 = vcmask 654336
  %v338 = vsel %vm337, %v336, 0.0
  %339 = vst [vmem:[%s14] sm:$0xff] %v338
  // Predicated region
  $region58: #{transition_forward.1} parent=0 // pred_check
    _
  $region59: #{transition_forward.1} parent=0 // pred_check_branch
    %341 = sbr.rel (0) target = $region61
  $region60: #{transition_forward.1} parent=0 // pred_region
    _
  $region61: #{transition_forward.1} parent=0 // pred_fallthru
    _
  // Predicated region
  $region62: #{transition_forward.1} parent=0 // pred_check
    _
  $region63: #{transition_forward.1} parent=0 // pred_check_branch
    %343 = sbr.rel (0) target = $region65
  $region64: #{transition_forward.1} parent=0 // pred_region
    _
  $region65: #{transition_forward.1} parent=0 // pred_fallthru
    _

</llo_original>
